<compile_context>
chip_gen: v5e
topology: v5e:2x2
jax: 0.10.0
libtpu: 0.0.40
codegen_flags: <defaults>
</compile_context>

<pallas_src>
import jax
import jax.numpy as jnp
from jax.experimental import pallas as pl
from jax.experimental.pallas import tpu as pltpu


def channel_attention(x, w1, b1, w2, b2):
    """ChannelAttention forward.

    x  : (B, C, L) float32  — PyTorch NCL layout, used directly (no transposes).
    w1 : (C//r, C) float32  — fc[0].weight (PyTorch layout, used as-is).
    b1 : (C//r,)   float32  — fc[0].bias.
    w2 : (C, C//r) float32  — fc[2].weight.
    b2 : (C,)      float32  — fc[2].bias.
    returns (B, C, L) float32 = x * sigmoid(fc2(relu(fc1(mean_L(x)))))
    """
    B, C, L = x.shape
    Cr = w1.shape[0]
    inv_l = 1.0 / float(L)

    # Tiny parameter reshapes only (scalar-sized, no activation copies).
    w1f = w1.astype(jnp.float32)
    w2f = w2.astype(jnp.float32)
    b1c = b1.reshape(Cr, 1).astype(jnp.float32)
    b2c = b2.reshape(C, 1).astype(jnp.float32)

    def kernel(x_ref, w1_ref, b1_ref, w2_ref, b2_ref, o_ref):
        xb = x_ref[0]                                              # (C, L) f32, VMEM-resident
        # AdaptiveAvgPool1d(1): mean over L, kept as a column vector (C, 1)
        # so no cross-lane transpose is ever needed.
        avg = jnp.sum(xb, axis=-1, keepdims=True) * inv_l          # (C, 1)
        # fc1 + ReLU and fc2 + sigmoid in column orientation:
        #   h = W1 @ avg + b1 ; att = sigmoid(W2 @ h + b2)
        h = jnp.maximum(
            jnp.dot(w1_ref[...], avg, preferred_element_type=jnp.float32) + b1_ref[...],
            0.0)                                                   # (C//r, 1)
        att = jax.nn.sigmoid(
            jnp.dot(w2_ref[...], h, preferred_element_type=jnp.float32) + b2_ref[...])  # (C, 1)
        # Channel rescale, fused: per-sublane scalar broadcast across the lane (L) axis.
        o_ref[0] = xb * att

    return pl.pallas_call(
        kernel,
        grid=(B,),
        in_specs=[
            pl.BlockSpec((1, C, L), lambda b: (b, 0, 0)),          # one batch element per step
            pl.BlockSpec((Cr, C), lambda b: (0, 0)),               # weights: constant blocks
            pl.BlockSpec((Cr, 1), lambda b: (0, 0)),
            pl.BlockSpec((C, Cr), lambda b: (0, 0)),
            pl.BlockSpec((C, 1), lambda b: (0, 0)),
        ],
        out_specs=pl.BlockSpec((1, C, L), lambda b: (b, 0, 0)),
        out_shape=jax.ShapeDtypeStruct((B, C, L), x.dtype),
        compiler_params=pltpu.CompilerParams(
            # B axis is embarrassingly parallel -> shards across v7x's 2 TensorCores.
            dimension_semantics=("parallel",),
        ),
    )(x, w1f, b1c, w2f, b2c)


# ----------------------------- pure-JAX reference ---------------------------

def channel_attention_ref(x, w1, b1, w2, b2):
    avg = jnp.mean(x, axis=-1)                                     # (B, C)
    h = jnp.maximum(avg @ w1.T + b1, 0.0)                          # (B, C//r)
    att = jax.nn.sigmoid(h @ w2.T + b2)                            # (B, C)
    return x * att[:, :, None]


# ---------------------------------- main ------------------------------------

if __name__ == "__main__":
    # Small shapes consistent with CSITransNet usage: channels=128, reduction=16.
    B, C, L, red = 2, 128, 128, 16
    Cr = C // red

    key = jax.random.PRNGKey(0)
    kx, k1, k2, k3, k4 = jax.random.split(key, 5)
    x = jax.random.normal(kx, (B, C, L), jnp.float32)
    w1 = jax.random.normal(k1, (Cr, C), jnp.float32) / jnp.sqrt(float(C))
    b1 = 0.1 * jax.random.normal(k2, (Cr,), jnp.float32)
    w2 = jax.random.normal(k3, (C, Cr), jnp.float32) / jnp.sqrt(float(Cr))
    b2 = 0.1 * jax.random.normal(k4, (C,), jnp.float32)

    fwd = jax.jit(channel_attention)
    out = jax.block_until_ready(fwd(x, w1, b1, w2, b2))
    assert out.shape == (B, C, L), out.shape

    ref = channel_attention_ref(x, w1, b1, w2, b2)
    err = float(jnp.max(jnp.abs(out - ref) / (1.0 + jnp.abs(ref))))
    assert err < 2e-2, f"reference mismatch: {err}"

    print("KERNEL_OK")
</pallas_src>

<mosaic_0001>
module attributes {stable_mosaic.version = 11 : i64} {
  func.func @kernel(%arg0: i32, %arg1: memref<1x128x128xf32, #tpu.memory_space<vmem>>, %arg2: memref<8x128xf32, #tpu.memory_space<vmem>>, %arg3: memref<8x1xf32, #tpu.memory_space<vmem>>, %arg4: memref<128x8xf32, #tpu.memory_space<vmem>>, %arg5: memref<128x1xf32, #tpu.memory_space<vmem>>, %arg6: memref<1x128x128xf32, #tpu.memory_space<vmem>>) attributes {dimension_semantics = [#tpu.dimension_semantics<parallel>], iteration_bounds = array<i64: 2>, scalar_prefetch = 0 : i64, scratch_operands = 0 : i64, tpu.core_type = #tpu.core_type<tc>, window_params = [{transform_indices = @transform_0, window_bounds = array<i64: 1, 128, 128>}, {pipeline_mode = #tpu.pipeline_mode<synchronous>, transform_indices = @transform_1, window_bounds = array<i64: 8, 128>}, {pipeline_mode = #tpu.pipeline_mode<synchronous>, transform_indices = @transform_2, window_bounds = array<i64: 8, 1>}, {pipeline_mode = #tpu.pipeline_mode<synchronous>, transform_indices = @transform_3, window_bounds = array<i64: 128, 8>}, {pipeline_mode = #tpu.pipeline_mode<synchronous>, transform_indices = @transform_4, window_bounds = array<i64: 128, 1>}, {transform_indices = @transform_5, window_bounds = array<i64: 1, 128, 128>}]} {
    %c0 = arith.constant 0 : index
    %c0_0 = arith.constant 0 : index
    %c0_1 = arith.constant 0 : index
    %0 = vector.load %arg1[%c0, %c0_0, %c0_1] : memref<1x128x128xf32, #tpu.memory_space<vmem>>, vector<1x128x128xf32>
    %1 = vector.shape_cast %0 : vector<1x128x128xf32> to vector<128x128xf32>
    %cst = arith.constant dense<0.000000e+00> : vector<128xf32>
    %2 = vector.multi_reduction <add>, %1, %cst [1] : vector<128x128xf32> to vector<128xf32>
    %3 = vector.shape_cast %2 : vector<128xf32> to vector<128x1xf32>
    %cst_2 = arith.constant 7.812500e-03 : f32
    %4 = vector.broadcast %cst_2 : f32 to vector<128x1xf32>
    %5 = arith.mulf %3, %4 : vector<128x1xf32>
    %c0_3 = arith.constant 0 : index
    %c0_4 = arith.constant 0 : index
    %6 = vector.load %arg2[%c0_3, %c0_4] : memref<8x128xf32, #tpu.memory_space<vmem>>, vector<8x128xf32>
    %cst_5 = arith.constant dense<0.000000e+00> : vector<8x1xf32>
    %7 = tpu.matmul %6, %5, %cst_5 {dimension_numbers = #tpu.dot_dimension_numbers<[1], [0], [0], [1], [0, 0, 1, 1], [], []>} : vector<8x128xf32>, vector<128x1xf32>, vector<8x1xf32> -> vector<8x1xf32>
    %c0_6 = arith.constant 0 : index
    %c0_7 = arith.constant 0 : index
    %8 = vector.load %arg3[%c0_6, %c0_7] : memref<8x1xf32, #tpu.memory_space<vmem>>, vector<8x1xf32>
    %9 = arith.addf %7, %8 : vector<8x1xf32>
    %cst_8 = arith.constant 0.000000e+00 : f32
    %10 = vector.broadcast %cst_8 : f32 to vector<8x1xf32>
    %11 = arith.maximumf %9, %10 : vector<8x1xf32>
    %c0_9 = arith.constant 0 : index
    %c0_10 = arith.constant 0 : index
    %12 = vector.load %arg4[%c0_9, %c0_10] : memref<128x8xf32, #tpu.memory_space<vmem>>, vector<128x8xf32>
    %cst_11 = arith.constant dense<0.000000e+00> : vector<128x1xf32>
    %13 = tpu.matmul %12, %11, %cst_11 {dimension_numbers = #tpu.dot_dimension_numbers<[1], [0], [0], [1], [0, 0, 1, 1], [], []>} : vector<128x8xf32>, vector<8x1xf32>, vector<128x1xf32> -> vector<128x1xf32>
    %c0_12 = arith.constant 0 : index
    %c0_13 = arith.constant 0 : index
    %14 = vector.load %arg5[%c0_12, %c0_13] : memref<128x1xf32, #tpu.memory_space<vmem>>, vector<128x1xf32>
    %15 = arith.addf %13, %14 : vector<128x1xf32>
    %16 = arith.negf %15 : vector<128x1xf32>
    %17 = math.exp %16 : vector<128x1xf32>
    %cst_14 = arith.constant 1.000000e+00 : f32
    %18 = vector.broadcast %cst_14 : f32 to vector<128x1xf32>
    %19 = arith.addf %18, %17 : vector<128x1xf32>
    %20 = arith.divf %18, %19 : vector<128x1xf32>
    %21 = vector.broadcast %20 : vector<128x1xf32> to vector<128x128xf32>
    %22 = arith.mulf %1, %21 : vector<128x128xf32>
    %c0_15 = arith.constant 0 : index
    %c0_16 = arith.constant 0 : index
    %c0_17 = arith.constant 0 : index
    %23 = vector.load %arg6[%c0_15, %c0_16, %c0_17] : memref<1x128x128xf32, #tpu.memory_space<vmem>>, vector<1x128x128xf32>
    %24 = vector.shape_cast %23 : vector<1x128x128xf32> to vector<128x128xf32>
    %25 = vector.shape_cast %22 : vector<128x128xf32> to vector<1x128x128xf32>
    tpu.vector_store %arg6[%c0_15, %c0_16, %c0_17], %25 {strides = array<i32>} : memref<1x128x128xf32, #tpu.memory_space<vmem>>, vector<1x128x128xf32>,
    return
  }
  func.func @transform_0(%arg0: i32) -> (i32, i32, i32) {
    %c0_i32 = arith.constant 0 : i32
    %c0_i32_0 = arith.constant 0 : i32
    %c0_i32_1 = arith.constant 0 : i32
    return %arg0, %c0_i32, %c0_i32_0 : i32, i32, i32
  }
  func.func @transform_1(%arg0: i32) -> (i32, i32) {
    %c0_i32 = arith.constant 0 : i32
    %c0_i32_0 = arith.constant 0 : i32
    %c0_i32_1 = arith.constant 0 : i32
    return %c0_i32, %c0_i32_0 : i32, i32
  }
  func.func @transform_2(%arg0: i32) -> (i32, i32) {
    %c0_i32 = arith.constant 0 : i32
    %c0_i32_0 = arith.constant 0 : i32
    %c0_i32_1 = arith.constant 0 : i32
    return %c0_i32, %c0_i32_0 : i32, i32
  }
  func.func @transform_3(%arg0: i32) -> (i32, i32) {
    %c0_i32 = arith.constant 0 : i32
    %c0_i32_0 = arith.constant 0 : i32
    %c0_i32_1 = arith.constant 0 : i32
    return %c0_i32, %c0_i32_0 : i32, i32
  }
  func.func @transform_4(%arg0: i32) -> (i32, i32) {
    %c0_i32 = arith.constant 0 : i32
    %c0_i32_0 = arith.constant 0 : i32
    %c0_i32_1 = arith.constant 0 : i32
    return %c0_i32, %c0_i32_0 : i32, i32
  }
  func.func @transform_5(%arg0: i32) -> (i32, i32, i32) {
    %c0_i32 = arith.constant 0 : i32
    %c0_i32_0 = arith.constant 0 : i32
    %c0_i32_1 = arith.constant 0 : i32
    return %arg0, %c0_i32, %c0_i32_0 : i32, i32, i32
  }
}

</mosaic_0001>

<llo_original>
// kernel: channel_attention.1
$region0: #{channel_attention.1}
  #allocation0 [shape = 'u32[]', space=smem, size = 0x4, offset = 0x4, fixed_abs, tag = 'smem constant byte address 0x4 - core index']
  #allocation1 [shape = 'u32[72,128]{1,0:T(1,128)}', space=vmem, size = 0x9000, scoped, tag = 'internal scratch']
  %s0 = inlined_call_operand.vmem [shape: f32[2,128,128], index: 0, kind: input, shape index: {}]
  %s1 = inlined_call_operand.vmem [shape: f32[8,128], index: 1, kind: input, shape index: {}]
  %s2 = inlined_call_operand.vmem [shape: f32[8,1], index: 2, kind: input, shape index: {}]
  %s3 = inlined_call_operand.vmem [shape: f32[128,8], index: 3, kind: input, shape index: {}]
  %s4 = inlined_call_operand.vmem [shape: f32[128,1], index: 4, kind: input, shape index: {}]
  %s5 = inlined_call_operand.hbm [shape: f32[2,128,128], index: 5, kind: output, shape index: {}]
  %s6 = sld [smem:[#allocation0]]
  $region53: #{channel_attention.1} parent=0
    _
  %s8 = ssub.s32 1, %s6
  %s9 = scalar_select 0, %s8, %s6
  $region1: #{channel_attention.1} parent=0
    #allocation2 [shape = 'u8[131072]{0}', space=vmem, size = 0x20000, scoped, tag = 'output window, operand 0']
    #allocation3 [shape = 's32[2]{0}', space=sflag, size = 0x8, scoped, tag = 'scoped memory for channel_attention.1']
    %10 = vsyncpa [#allocation3], 0
    %s11 = scalar_lea.sflag [#allocation3], 1
    %12 = vsyncpa %s11, 0
    loop: start=0, step=1, limit=4
    $region2: #{channel_attention.1} parent=1 // loop_pre_header
      _
    $region3: #{channel_attention.1} parent=1 // loop_header
      %s14 = sphi 0, %s18
      %p15 = scmp.ge.s32.totalorder %s14, 4
      %s24 = sphi 0, %s26
      %s27 = sphi 0, %s24
      %s28 = sphi 0, %s27
      %s44 = sphi 0, %s28
      %s48 = sphi 0, %s48
      %s50 = sphi 0, %s48
      %s51 = sphi 0, %s50
      %s65 = sphi 0, %s51
      %s69 = sphi 0, %s69
      %s71 = sphi 0, %s69
      %s72 = sphi 0, %s71
      %s86 = sphi 0, %s72
      %s90 = sphi 0, %s90
      %s92 = sphi 0, %s90
      %s93 = sphi 0, %s92
      %s107 = sphi 0, %s93
      %s111 = sphi 0, %s111
      %s113 = sphi 0, %s111
      %s114 = sphi 0, %s113
      %s128 = sphi 0, %s114
      %s134 = sphi 0, %s136
      %s137 = sphi 0, %s134
      %s138 = sphi 0, %s137
      %s154 = sphi 0, %s138
    $region4: #{channel_attention.1} parent=1 // loop_header_branch
      %17 = sbr.rel (%p15) target = $region8
    $region5: #{channel_attention.1} parent=1 // loop_body
      %s19 = ssub.s32 %s14, 1
      %s20 = ssub.s32 %s14, 2
      %s21 = sadd.s32 %s14, 1
      %s22 = ssub.s32 %s14, %s21
      %p23 = scmp.eq.s32.totalorder %s22, 0
      %s25 = sadd.s32 %s24, 1
      %s26 = scalar_select %p23, %s24, %s25
      %p29 = pneg %p23
      %p30 = scmp.eq.s32.totalorder %s14, 1
      %p31 = por %p29, %p30
      %p32 = scmp.ne.s32.totalorder %s24, %s27
      %p33 = scmp.eq.s32.totalorder %s14, 0
      %p34 = por %p32, %p33
      %p35 = scmp.ne.s32.totalorder %s24, %s27
      %p36 = scmp.eq.s32.totalorder %s19, 1
      %p37 = por %p35, %p36
      %p38 = scmp.ne.s32.totalorder %s27, %s28
      %p39 = scmp.eq.s32.totalorder %s19, 0
      %p40 = por %p38, %p39
      %p41 = scmp.ne.s32.totalorder %s27, %s28
      %p42 = scmp.eq.s32.totalorder %s20, 1
      %p43 = por %p41, %p42
      %p45 = scmp.ne.s32.totalorder %s28, %s44
      %p46 = scmp.eq.s32.totalorder %s20, 0
      %p47 = por %p45, %p46
      %s49 = sadd.s32 %s48, 1
      %p52 = scmp.eq.s32.totalorder %s14, 1
      %p53 = scmp.ne.s32.totalorder %s48, %s50
      %p54 = scmp.eq.s32.totalorder %s14, 0
      %p55 = por %p53, %p54
      %p56 = scmp.ne.s32.totalorder %s48, %s50
      %p57 = scmp.eq.s32.totalorder %s19, 1
      %p58 = por %p56, %p57
      %p59 = scmp.ne.s32.totalorder %s50, %s51
      %p60 = scmp.eq.s32.totalorder %s19, 0
      %p61 = por %p59, %p60
      %p62 = scmp.ne.s32.totalorder %s50, %s51
      %p63 = scmp.eq.s32.totalorder %s20, 1
      %p64 = por %p62, %p63
      %p66 = scmp.ne.s32.totalorder %s51, %s65
      %p67 = scmp.eq.s32.totalorder %s20, 0
      %p68 = por %p66, %p67
      %s70 = sadd.s32 %s69, 1
      %p73 = scmp.eq.s32.totalorder %s14, 1
      %p74 = scmp.ne.s32.totalorder %s69, %s71
      %p75 = scmp.eq.s32.totalorder %s14, 0
      %p76 = por %p74, %p75
      %p77 = scmp.ne.s32.totalorder %s69, %s71
      %p78 = scmp.eq.s32.totalorder %s19, 1
      %p79 = por %p77, %p78
      %p80 = scmp.ne.s32.totalorder %s71, %s72
      %p81 = scmp.eq.s32.totalorder %s19, 0
      %p82 = por %p80, %p81
      %p83 = scmp.ne.s32.totalorder %s71, %s72
      %p84 = scmp.eq.s32.totalorder %s20, 1
      %p85 = por %p83, %p84
      %p87 = scmp.ne.s32.totalorder %s72, %s86
      %p88 = scmp.eq.s32.totalorder %s20, 0
      %p89 = por %p87, %p88
      %s91 = sadd.s32 %s90, 1
      %p94 = scmp.eq.s32.totalorder %s14, 1
      %p95 = scmp.ne.s32.totalorder %s90, %s92
      %p96 = scmp.eq.s32.totalorder %s14, 0
      %p97 = por %p95, %p96
      %p98 = scmp.ne.s32.totalorder %s90, %s92
      %p99 = scmp.eq.s32.totalorder %s19, 1
      %p100 = por %p98, %p99
      %p101 = scmp.ne.s32.totalorder %s92, %s93
      %p102 = scmp.eq.s32.totalorder %s19, 0
      %p103 = por %p101, %p102
      %p104 = scmp.ne.s32.totalorder %s92, %s93
      %p105 = scmp.eq.s32.totalorder %s20, 1
      %p106 = por %p104, %p105
      %p108 = scmp.ne.s32.totalorder %s93, %s107
      %p109 = scmp.eq.s32.totalorder %s20, 0
      %p110 = por %p108, %p109
      %s112 = sadd.s32 %s111, 1
      %p115 = scmp.eq.s32.totalorder %s14, 1
      %p116 = scmp.ne.s32.totalorder %s111, %s113
      %p117 = scmp.eq.s32.totalorder %s14, 0
      %p118 = por %p116, %p117
      %p119 = scmp.ne.s32.totalorder %s111, %s113
      %p120 = scmp.eq.s32.totalorder %s19, 1
      %p121 = por %p119, %p120
      %p122 = scmp.ne.s32.totalorder %s113, %s114
      %p123 = scmp.eq.s32.totalorder %s19, 0
      %p124 = por %p122, %p123
      %p125 = scmp.ne.s32.totalorder %s113, %s114
      %p126 = scmp.eq.s32.totalorder %s20, 1
      %p127 = por %p125, %p126
      %p129 = scmp.ne.s32.totalorder %s114, %s128
      %p130 = scmp.eq.s32.totalorder %s20, 0
      %p131 = por %p129, %p130
      %s132 = ssub.s32 %s14, %s21
      %p133 = scmp.eq.s32.totalorder %s132, 0
      %s135 = sadd.s32 %s134, 1
      %s136 = scalar_select %p133, %s134, %s135
      %p139 = pneg %p133
      %p140 = scmp.eq.s32.totalorder %s14, 1
      %p141 = por %p139, %p140
      %p142 = scmp.ne.s32.totalorder %s134, %s137
      %p143 = scmp.eq.s32.totalorder %s14, 0
      %p144 = por %p142, %p143
      %p145 = scmp.ne.s32.totalorder %s134, %s137
      %p146 = scmp.eq.s32.totalorder %s19, 1
      %p147 = por %p145, %p146
      %p148 = scmp.ne.s32.totalorder %s137, %s138
      %p149 = scmp.eq.s32.totalorder %s19, 0
      %p150 = por %p148, %p149
      %p151 = scmp.ne.s32.totalorder %s137, %s138
      %p152 = scmp.eq.s32.totalorder %s20, 1
      %p153 = por %p151, %p152
      %p155 = scmp.ne.s32.totalorder %s138, %s154
      %p156 = scmp.eq.s32.totalorder %s20, 0
      %p157 = por %p155, %p156
      %p158 = scmp.le.s32.totalorder 1, %s14
      %p159 = scmp.lt.s32.totalorder %s14, 3
      %p160 = pnand %p158, %p159
      %p161 = pneg %p160
      // Predicated region
      $region9: #{channel_attention.1} parent=5 // pred_check
        _
      $region10: #{channel_attention.1} parent=5 // pred_check_branch
        %163 = sbr.rel (%p160) target = $region12
      $region11: #{channel_attention.1} parent=5 // pred_region
        %s164 = ssub.s32 %s14, 1
        // Predicated region
        $region13: #{channel_attention.1} parent=11 // pred_check
          %p165 = pneg %p61
        $region14: #{channel_attention.1} parent=11 // pred_check_branch
          %167 = sbr.rel (%p165) target = $region16
        $region15: #{channel_attention.1} parent=11 // pred_region
          _
        $region16: #{channel_attention.1} parent=11 // pred_fallthru
          _
        // Predicated region
        $region17: #{channel_attention.1} parent=11 // pred_check
          %p168 = pneg %p82
        $region18: #{channel_attention.1} parent=11 // pred_check_branch
          %170 = sbr.rel (%p168) target = $region20
        $region19: #{channel_attention.1} parent=11 // pred_region
          _
        $region20: #{channel_attention.1} parent=11 // pred_fallthru
          _
        // Predicated region
        $region21: #{channel_attention.1} parent=11 // pred_check
          %p171 = pneg %p103
        $region22: #{channel_attention.1} parent=11 // pred_check_branch
          %173 = sbr.rel (%p171) target = $region24
        $region23: #{channel_attention.1} parent=11 // pred_region
          _
        $region24: #{channel_attention.1} parent=11 // pred_fallthru
          _
        // Predicated region
        $region25: #{channel_attention.1} parent=11 // pred_check
          %p174 = pneg %p124
        $region26: #{channel_attention.1} parent=11 // pred_check_branch
          %176 = sbr.rel (%p174) target = $region28
        $region27: #{channel_attention.1} parent=11 // pred_region
          _
        $region28: #{channel_attention.1} parent=11 // pred_fallthru
          _
      $region12: #{channel_attention.1} parent=5 // pred_fallthru
        _
      %p177 = scmp.lt.s32.totalorder %s14, 2
      // Predicated region
      $region29: #{channel_attention.1} parent=5 // pred_check
        %p178 = pneg %p177
      $region30: #{channel_attention.1} parent=5 // pred_check_branch
        %180 = sbr.rel (%p178) target = $region32
      $region31: #{channel_attention.1} parent=5 // pred_region
        // Predicated region
        $region33: #{channel_attention.1} parent=31 // pred_check
          %p181 = pneg %p34
        $region34: #{channel_attention.1} parent=31 // pred_check_branch
          %183 = sbr.rel (%p181) target = $region36
        $region35: #{channel_attention.1} parent=31 // pred_region
          %p184 = scmp.lt.s32.totalorder %s14, 1
          %s185 = scalar_select %p184, %s14, 1
          %s186 = smul.addr %s185, 16
          %s187 = smul.addr %s186, 8
          %s188 = scalar_lea.vmem %s0, %s187
        $region36: #{channel_attention.1} parent=31 // pred_fallthru
          _
      $region32: #{channel_attention.1} parent=5 // pred_fallthru
        _
      %p189 = scmp.le.s32.totalorder 1, %s14
      %p190 = scmp.lt.s32.totalorder %s14, 3
      %p191 = pnand %p189, %p190
      %p192 = pneg %p191
      // Predicated region
      $region37: #{channel_attention.1} parent=5 // pred_check
        _
      $region38: #{channel_attention.1} parent=5 // pred_check_branch
        %194 = sbr.rel (%p191) target = $region40
      $region39: #{channel_attention.1} parent=5 // pred_region
        %s195 = ssub.s32 %s14, 1
        %p196 = scmp.lt.s32.totalorder %s19, 1
        %s197 = scalar_select %p196, %s19, 1
        %s198 = smul.addr %s197, 16
        %s199 = smul.addr %s198, 8
        %s200 = scalar_lea.vmem %s0, %s199
        %p201 = pneg %p40
        %p202 = pneg %p37
        %p203 = pneg %p61
        %p204 = pneg %p58
        %p205 = pneg %p82
        %p206 = pneg %p79
        %p207 = pneg %p103
        %p208 = pneg %p100
        %p209 = pneg %p124
        %p210 = pneg %p121
        %p211 = pneg %p150
        %p212 = pneg %p147
        %s213 = sand.u32 %s137, 1
        %s214 = scalar_lea.sflag [#allocation3], %s213
        %s215 = sand.u32 %s137, 1
        %s216 = smul.addr %s215, 128
        %s217 = scalar_lea.vmem [#allocation2], %s216
        %p218 = scmp.lt.s32.totalorder %s19, 1
        %s219 = scalar_select %p218, %s19, 1
        %s220 = smul.addr %s219, 16
        %s221 = smul.addr %s220, 8
        %s222 = scalar_lea.vmem %s0, %s221
        %v223 = vld [vmem:[%s222] sm:$0xff]
        %v224 = vld [vmem:[%s222 + $0x8] sm:$0xff]
        %v225 = vld [vmem:[%s222 + $0x10] sm:$0xff]
        %v226 = vld [vmem:[%s222 + $0x18] sm:$0xff]
        %v227 = vld [vmem:[%s222 + $0x20] sm:$0xff]
        %v228 = vld [vmem:[%s222 + $0x28] sm:$0xff]
        %v229 = vld [vmem:[%s222 + $0x30] sm:$0xff]
        %v230 = vld [vmem:[%s222 + $0x38] sm:$0xff]
        %v231 = vld [vmem:[%s222 + $0x40] sm:$0xff]
        %v232 = vld [vmem:[%s222 + $0x48] sm:$0xff]
        %v233 = vld [vmem:[%s222 + $0x50] sm:$0xff]
        %v234 = vld [vmem:[%s222 + $0x58] sm:$0xff]
        %v235 = vld [vmem:[%s222 + $0x60] sm:$0xff]
        %v236 = vld [vmem:[%s222 + $0x68] sm:$0xff]
        %v237 = vld [vmem:[%s222 + $0x70] sm:$0xff]
        %v238 = vld [vmem:[%s222 + $0x78] sm:$0xff]
        %239 = vadd.xlane.f32.xlu0 %v223
        %v240 = vpop.xlane.xlu0 %239
        %241 = vadd.xlane.f32.xlu0 %v224
        %v242 = vpop.xlane.xlu0 %241
        %243 = vadd.xlane.f32.xlu0 %v225
        %v244 = vpop.xlane.xlu0 %243
        %245 = vadd.xlane.f32.xlu0 %v226
        %v246 = vpop.xlane.xlu0 %245
        %247 = vadd.xlane.f32.xlu0 %v227
        %v248 = vpop.xlane.xlu0 %247
        %249 = vadd.xlane.f32.xlu0 %v228
        %v250 = vpop.xlane.xlu0 %249
        %251 = vadd.xlane.f32.xlu0 %v229
        %v252 = vpop.xlane.xlu0 %251
        %253 = vadd.xlane.f32.xlu0 %v230
        %v254 = vpop.xlane.xlu0 %253
        %255 = vadd.xlane.f32.xlu0 %v231
        %v256 = vpop.xlane.xlu0 %255
        %257 = vadd.xlane.f32.xlu0 %v232
        %v258 = vpop.xlane.xlu0 %257
        %259 = vadd.xlane.f32.xlu0 %v233
        %v260 = vpop.xlane.xlu0 %259
        %261 = vadd.xlane.f32.xlu0 %v234
        %v262 = vpop.xlane.xlu0 %261
        %263 = vadd.xlane.f32.xlu0 %v235
        %v264 = vpop.xlane.xlu0 %263
        %265 = vadd.xlane.f32.xlu0 %v236
        %v266 = vpop.xlane.xlu0 %265
        %267 = vadd.xlane.f32.xlu0 %v237
        %v268 = vpop.xlane.xlu0 %267
        %269 = vadd.xlane.f32.xlu0 %v238
        %v270 = vpop.xlane.xlu0 %269
        %v271 = vmul.f32 %v240, 0.0078125
        %v272 = vmul.f32 %v242, 0.0078125
        %v273 = vmul.f32 %v244, 0.0078125
        %v274 = vmul.f32 %v246, 0.0078125
        %v275 = vmul.f32 %v248, 0.0078125
        %v276 = vmul.f32 %v250, 0.0078125
        %v277 = vmul.f32 %v252, 0.0078125
        %v278 = vmul.f32 %v254, 0.0078125
        %v279 = vmul.f32 %v256, 0.0078125
        %v280 = vmul.f32 %v258, 0.0078125
        %v281 = vmul.f32 %v260, 0.0078125
        %v282 = vmul.f32 %v262, 0.0078125
        %v283 = vmul.f32 %v264, 0.0078125
        %v284 = vmul.f32 %v266, 0.0078125
        %v285 = vmul.f32 %v268, 0.0078125
        %v286 = vmul.f32 %v270, 0.0078125
        %v287 = vld [vmem:[%s1] sm:$0xff]
        %v288 = vld [vmem:[%s2] sm:$0xff]
        %289 = vmatpush.msra.mxu0 %v286
        %290 = vmatpush.msra.mxu0 %v285
        %291 = vmatpush.msra.mxu0 %v284
        %292 = vmatpush.msra.mxu0 %v283
        %293 = vmatpush.msra.mxu0 %v282
        %294 = vmatpush.msra.mxu0 %v281
        %295 = vmatpush.msra.mxu0 %v280
        %296 = vmatpush.msra.mxu0 %v279
        %297 = vmatpush.msra.mxu0 %v278
        %298 = vmatpush.msra.mxu0 %v277
        %299 = vmatpush.msra.mxu0 %v276
        %300 = vmatpush.msra.mxu0 %v275
        %301 = vmatpush.msra.mxu0 %v274
        %302 = vmatpush.msra.mxu0 %v273
        %303 = vmatpush.msra.mxu0 %v272
        %304 = vmatpush.msra.mxu0 %v271
        %305 = vmatmul.f32.gmra.mxu0 %v287
        %v306 = vpop.f32.mrf.mxu0
        %v307 = vadd.f32 %v288, %v306
        %308 = vdwg.mxu0
        %v309 = vmax.f32 %v307, 0.0
        %v310 = vld [vmem:[%s3] sm:$0xff]
        %v311 = vld [vmem:[%s3 + $0x8] sm:$0xff]
        %v312 = vld [vmem:[%s3 + $0x10] sm:$0xff]
        %v313 = vld [vmem:[%s3 + $0x18] sm:$0xff]
        %v314 = vld [vmem:[%s3 + $0x20] sm:$0xff]
        %v315 = vld [vmem:[%s3 + $0x28] sm:$0xff]
        %v316 = vld [vmem:[%s3 + $0x30] sm:$0xff]
        %v317 = vld [vmem:[%s3 + $0x38] sm:$0xff]
        %v318 = vld [vmem:[%s3 + $0x40] sm:$0xff]
        %v319 = vld [vmem:[%s3 + $0x48] sm:$0xff]
        %v320 = vld [vmem:[%s3 + $0x50] sm:$0xff]
        %v321 = vld [vmem:[%s3 + $0x58] sm:$0xff]
        %v322 = vld [vmem:[%s3 + $0x60] sm:$0xff]
        %v323 = vld [vmem:[%s3 + $0x68] sm:$0xff]
        %v324 = vld [vmem:[%s3 + $0x70] sm:$0xff]
        %v325 = vld [vmem:[%s3 + $0x78] sm:$0xff]
        %v326 = vld [vmem:[%s4] sm:$0xff]
        %v327 = vld [vmem:[%s4 + $0x8] sm:$0xff]
        %v328 = vld [vmem:[%s4 + $0x10] sm:$0xff]
        %v329 = vld [vmem:[%s4 + $0x18] sm:$0xff]
        %v330 = vld [vmem:[%s4 + $0x20] sm:$0xff]
        %v331 = vld [vmem:[%s4 + $0x28] sm:$0xff]
        %v332 = vld [vmem:[%s4 + $0x30] sm:$0xff]
        %v333 = vld [vmem:[%s4 + $0x38] sm:$0xff]
        %v334 = vld [vmem:[%s4 + $0x40] sm:$0xff]
        %v335 = vld [vmem:[%s4 + $0x48] sm:$0xff]
        %v336 = vld [vmem:[%s4 + $0x50] sm:$0xff]
        %v337 = vld [vmem:[%s4 + $0x58] sm:$0xff]
        %v338 = vld [vmem:[%s4 + $0x60] sm:$0xff]
        %v339 = vld [vmem:[%s4 + $0x68] sm:$0xff]
        %v340 = vld [vmem:[%s4 + $0x70] sm:$0xff]
        %v341 = vld [vmem:[%s4 + $0x78] sm:$0xff]
        %vm342 = vcmask 64512
        %v344 = vsel %vm342, %v310, 0
        %v347 = vsel %vm342, %v311, 0
        %v350 = vsel %vm342, %v312, 0
        %v353 = vsel %vm342, %v313, 0
        %v356 = vsel %vm342, %v314, 0
        %v359 = vsel %vm342, %v315, 0
        %v362 = vsel %vm342, %v316, 0
        %v365 = vsel %vm342, %v317, 0
        %v368 = vsel %vm342, %v318, 0
        %v371 = vsel %vm342, %v319, 0
        %v374 = vsel %vm342, %v320, 0
        %v377 = vsel %vm342, %v321, 0
        %v380 = vsel %vm342, %v322, 0
        %v383 = vsel %vm342, %v323, 0
        %v386 = vsel %vm342, %v324, 0
        %v389 = vsel %vm342, %v325, 0
        %391 = vmatpush.msra.mxu0 0.0
        %392 = vmatpush.msra.mxu0 0.0
        %393 = vmatpush.msra.mxu0 0.0
        %394 = vmatpush.msra.mxu0 0.0
        %395 = vmatpush.msra.mxu0 0.0
        %396 = vmatpush.msra.mxu0 0.0
        %397 = vmatpush.msra.mxu0 0.0
        %398 = vmatpush.msra.mxu0 0.0
        %399 = vmatpush.msra.mxu0 0.0
        %400 = vmatpush.msra.mxu0 0.0
        %401 = vmatpush.msra.mxu0 0.0
        %402 = vmatpush.msra.mxu0 0.0
        %403 = vmatpush.msra.mxu0 0.0
        %404 = vmatpush.msra.mxu0 0.0
        %405 = vmatpush.msra.mxu0 0.0
        %406 = vmatpush.msra.mxu0 %v309
        %407 = vmatmul.f32.gmra.mxu0 %v344
        %v408 = vpop.f32.mrf.mxu0
        %v409 = vadd.f32 %v326, %v408
        %410 = vmatmul.f32.gmra.mxu0 %v347
        %v411 = vpop.f32.mrf.mxu0
        %v412 = vadd.f32 %v327, %v411
        %413 = vmatmul.f32.gmra.mxu0 %v350
        %v414 = vpop.f32.mrf.mxu0
        %v415 = vadd.f32 %v328, %v414
        %416 = vmatmul.f32.gmra.mxu0 %v353
        %v417 = vpop.f32.mrf.mxu0
        %v418 = vadd.f32 %v329, %v417
        %419 = vmatmul.f32.gmra.mxu0 %v356
        %v420 = vpop.f32.mrf.mxu0
        %v421 = vadd.f32 %v330, %v420
        %422 = vmatmul.f32.gmra.mxu0 %v359
        %v423 = vpop.f32.mrf.mxu0
        %v424 = vadd.f32 %v331, %v423
        %425 = vmatmul.f32.gmra.mxu0 %v362
        %v426 = vpop.f32.mrf.mxu0
        %v427 = vadd.f32 %v332, %v426
        %428 = vmatmul.f32.gmra.mxu0 %v365
        %v429 = vpop.f32.mrf.mxu0
        %v430 = vadd.f32 %v333, %v429
        %431 = vmatmul.f32.gmra.mxu0 %v368
        %v432 = vpop.f32.mrf.mxu0
        %v433 = vadd.f32 %v334, %v432
        %434 = vmatmul.f32.gmra.mxu0 %v371
        %v435 = vpop.f32.mrf.mxu0
        %v436 = vadd.f32 %v335, %v435
        %437 = vmatmul.f32.gmra.mxu0 %v374
        %v438 = vpop.f32.mrf.mxu0
        %v439 = vadd.f32 %v336, %v438
        %440 = vmatmul.f32.gmra.mxu0 %v377
        %v441 = vpop.f32.mrf.mxu0
        %v442 = vadd.f32 %v337, %v441
        %443 = vmatmul.f32.gmra.mxu0 %v380
        %v444 = vpop.f32.mrf.mxu0
        %v445 = vadd.f32 %v338, %v444
        %446 = vmatmul.f32.gmra.mxu0 %v383
        %v447 = vpop.f32.mrf.mxu0
        %v448 = vadd.f32 %v339, %v447
        %449 = vmatmul.f32.gmra.mxu0 %v386
        %v450 = vpop.f32.mrf.mxu0
        %v451 = vadd.f32 %v340, %v450
        %452 = vmatmul.f32.gmra.mxu0 %v389
        %v453 = vpop.f32.mrf.mxu0
        %v454 = vadd.f32 %v341, %v453
        %455 = vdwg.mxu0
        %v456 = vxor.u32 %v409, 2147483648
        %v457 = vxor.u32 %v412, 2147483648
        %v458 = vxor.u32 %v415, 2147483648
        %v459 = vxor.u32 %v418, 2147483648
        %v460 = vxor.u32 %v421, 2147483648
        %v461 = vxor.u32 %v424, 2147483648
        %v462 = vxor.u32 %v427, 2147483648
        %v463 = vxor.u32 %v430, 2147483648
        %v464 = vxor.u32 %v433, 2147483648
        %v465 = vxor.u32 %v436, 2147483648
        %v466 = vxor.u32 %v439, 2147483648
        %v467 = vxor.u32 %v442, 2147483648
        %v468 = vxor.u32 %v445, 2147483648
        %v469 = vxor.u32 %v448, 2147483648
        %v470 = vxor.u32 %v451, 2147483648
        %v471 = vxor.u32 %v454, 2147483648
        %v472 = vmul.f32 %v456, 1.442695
        %v473 = vpow.pop %v472
        %v474 = vmul.f32 %v457, 1.442695
        %v475 = vpow.pop %v474
        %v476 = vmul.f32 %v458, 1.442695
        %v477 = vpow.pop %v476
        %v478 = vmul.f32 %v459, 1.442695
        %v479 = vpow.pop %v478
        %v480 = vmul.f32 %v460, 1.442695
        %v481 = vpow.pop %v480
        %v482 = vmul.f32 %v461, 1.442695
        %v483 = vpow.pop %v482
        %v484 = vmul.f32 %v462, 1.442695
        %v485 = vpow.pop %v484
        %v486 = vmul.f32 %v463, 1.442695
        %v487 = vpow.pop %v486
        %v488 = vmul.f32 %v464, 1.442695
        %v489 = vpow.pop %v488
        %v490 = vmul.f32 %v465, 1.442695
        %v491 = vpow.pop %v490
        %v492 = vmul.f32 %v466, 1.442695
        %v493 = vpow.pop %v492
        %v494 = vmul.f32 %v467, 1.442695
        %v495 = vpow.pop %v494
        %v496 = vmul.f32 %v468, 1.442695
        %v497 = vpow.pop %v496
        %v498 = vmul.f32 %v469, 1.442695
        %v499 = vpow.pop %v498
        %v500 = vmul.f32 %v470, 1.442695
        %v501 = vpow.pop %v500
        %v502 = vmul.f32 %v471, 1.442695
        %v503 = vpow.pop %v502
        %v504 = vadd.f32 %v473, 1.0
        %v505 = vadd.f32 %v475, 1.0
        %v506 = vadd.f32 %v477, 1.0
        %v507 = vadd.f32 %v479, 1.0
        %v508 = vadd.f32 %v481, 1.0
        %v509 = vadd.f32 %v483, 1.0
        %v510 = vadd.f32 %v485, 1.0
        %v511 = vadd.f32 %v487, 1.0
        %v512 = vadd.f32 %v489, 1.0
        %v513 = vadd.f32 %v491, 1.0
        %v514 = vadd.f32 %v493, 1.0
        %v515 = vadd.f32 %v495, 1.0
        %v516 = vadd.f32 %v497, 1.0
        %v517 = vadd.f32 %v499, 1.0
        %v518 = vadd.f32 %v501, 1.0
        %v519 = vadd.f32 %v503, 1.0
        %v520 = vrcp.pop %v504
        %v521 = vmul.f32 %v504, %v520
        %v522 = vsub.f32 1.0, %v521
        %v523 = vmul.f32 %v520, %v522
        %v524 = vadd.f32 %v520, %v523
        %vm525 = vweird.f32 %v504
        %vm526 = vweird.f32 %v520
        %vm527 = vmor %vm525, %vm526
        %v528 = vsel %vm527, %v520, %v524
        %v529 = vand.u32 2147483647, %v504
        %vm530 = vcmp.eq.f32.partialorder %v529, 8.507059e+37
        %v531 = vand.u32 %v504, 2147483648
        %v532 = vor.u32 1.1754944e-38, %v531
        %v533 = vsel %vm530, %v532, %v528
        %v534 = vmul.f32 1.0, %v533
        %v535 = vrcp.pop %v505
        %v536 = vmul.f32 %v505, %v535
        %v537 = vsub.f32 1.0, %v536
        %v538 = vmul.f32 %v535, %v537
        %v539 = vadd.f32 %v535, %v538
        %vm540 = vweird.f32 %v505
        %vm541 = vweird.f32 %v535
        %vm542 = vmor %vm540, %vm541
        %v543 = vsel %vm542, %v535, %v539
        %v544 = vand.u32 2147483647, %v505
        %vm545 = vcmp.eq.f32.partialorder %v544, 8.507059e+37
        %v546 = vand.u32 %v505, 2147483648
        %v547 = vor.u32 1.1754944e-38, %v546
        %v548 = vsel %vm545, %v547, %v543
        %v549 = vmul.f32 1.0, %v548
        %v550 = vrcp.pop %v506
        %v551 = vmul.f32 %v506, %v550
        %v552 = vsub.f32 1.0, %v551
        %v553 = vmul.f32 %v550, %v552
        %v554 = vadd.f32 %v550, %v553
        %vm555 = vweird.f32 %v506
        %vm556 = vweird.f32 %v550
        %vm557 = vmor %vm555, %vm556
        %v558 = vsel %vm557, %v550, %v554
        %v559 = vand.u32 2147483647, %v506
        %vm560 = vcmp.eq.f32.partialorder %v559, 8.507059e+37
        %v561 = vand.u32 %v506, 2147483648
        %v562 = vor.u32 1.1754944e-38, %v561
        %v563 = vsel %vm560, %v562, %v558
        %v564 = vmul.f32 1.0, %v563
        %v565 = vrcp.pop %v507
        %v566 = vmul.f32 %v507, %v565
        %v567 = vsub.f32 1.0, %v566
        %v568 = vmul.f32 %v565, %v567
        %v569 = vadd.f32 %v565, %v568
        %vm570 = vweird.f32 %v507
        %vm571 = vweird.f32 %v565
        %vm572 = vmor %vm570, %vm571
        %v573 = vsel %vm572, %v565, %v569
        %v574 = vand.u32 2147483647, %v507
        %vm575 = vcmp.eq.f32.partialorder %v574, 8.507059e+37
        %v576 = vand.u32 %v507, 2147483648
        %v577 = vor.u32 1.1754944e-38, %v576
        %v578 = vsel %vm575, %v577, %v573
        %v579 = vmul.f32 1.0, %v578
        %v580 = vrcp.pop %v508
        %v581 = vmul.f32 %v508, %v580
        %v582 = vsub.f32 1.0, %v581
        %v583 = vmul.f32 %v580, %v582
        %v584 = vadd.f32 %v580, %v583
        %vm585 = vweird.f32 %v508
        %vm586 = vweird.f32 %v580
        %vm587 = vmor %vm585, %vm586
        %v588 = vsel %vm587, %v580, %v584
        %v589 = vand.u32 2147483647, %v508
        %vm590 = vcmp.eq.f32.partialorder %v589, 8.507059e+37
        %v591 = vand.u32 %v508, 2147483648
        %v592 = vor.u32 1.1754944e-38, %v591
        %v593 = vsel %vm590, %v592, %v588
        %v594 = vmul.f32 1.0, %v593
        %v595 = vrcp.pop %v509
        %v596 = vmul.f32 %v509, %v595
        %v597 = vsub.f32 1.0, %v596
        %v598 = vmul.f32 %v595, %v597
        %v599 = vadd.f32 %v595, %v598
        %vm600 = vweird.f32 %v509
        %vm601 = vweird.f32 %v595
        %vm602 = vmor %vm600, %vm601
        %v603 = vsel %vm602, %v595, %v599
        %v604 = vand.u32 2147483647, %v509
        %vm605 = vcmp.eq.f32.partialorder %v604, 8.507059e+37
        %v606 = vand.u32 %v509, 2147483648
        %v607 = vor.u32 1.1754944e-38, %v606
        %v608 = vsel %vm605, %v607, %v603
        %v609 = vmul.f32 1.0, %v608
        %v610 = vrcp.pop %v510
        %v611 = vmul.f32 %v510, %v610
        %v612 = vsub.f32 1.0, %v611
        %v613 = vmul.f32 %v610, %v612
        %v614 = vadd.f32 %v610, %v613
        %vm615 = vweird.f32 %v510
        %vm616 = vweird.f32 %v610
        %vm617 = vmor %vm615, %vm616
        %v618 = vsel %vm617, %v610, %v614
        %v619 = vand.u32 2147483647, %v510
        %vm620 = vcmp.eq.f32.partialorder %v619, 8.507059e+37
        %v621 = vand.u32 %v510, 2147483648
        %v622 = vor.u32 1.1754944e-38, %v621
        %v623 = vsel %vm620, %v622, %v618
        %v624 = vmul.f32 1.0, %v623
        %v625 = vrcp.pop %v511
        %v626 = vmul.f32 %v511, %v625
        %v627 = vsub.f32 1.0, %v626
        %v628 = vmul.f32 %v625, %v627
        %v629 = vadd.f32 %v625, %v628
        %vm630 = vweird.f32 %v511
        %vm631 = vweird.f32 %v625
        %vm632 = vmor %vm630, %vm631
        %v633 = vsel %vm632, %v625, %v629
        %v634 = vand.u32 2147483647, %v511
        %vm635 = vcmp.eq.f32.partialorder %v634, 8.507059e+37
        %v636 = vand.u32 %v511, 2147483648
        %v637 = vor.u32 1.1754944e-38, %v636
        %v638 = vsel %vm635, %v637, %v633
        %v639 = vmul.f32 1.0, %v638
        %v640 = vrcp.pop %v512
        %v641 = vmul.f32 %v512, %v640
        %v642 = vsub.f32 1.0, %v641
        %v643 = vmul.f32 %v640, %v642
        %v644 = vadd.f32 %v640, %v643
        %vm645 = vweird.f32 %v512
        %vm646 = vweird.f32 %v640
        %vm647 = vmor %vm645, %vm646
        %v648 = vsel %vm647, %v640, %v644
        %v649 = vand.u32 2147483647, %v512
        %vm650 = vcmp.eq.f32.partialorder %v649, 8.507059e+37
        %v651 = vand.u32 %v512, 2147483648
        %v652 = vor.u32 1.1754944e-38, %v651
        %v653 = vsel %vm650, %v652, %v648
        %v654 = vmul.f32 1.0, %v653
        %v655 = vrcp.pop %v513
        %v656 = vmul.f32 %v513, %v655
        %v657 = vsub.f32 1.0, %v656
        %v658 = vmul.f32 %v655, %v657
        %v659 = vadd.f32 %v655, %v658
        %vm660 = vweird.f32 %v513
        %vm661 = vweird.f32 %v655
        %vm662 = vmor %vm660, %vm661
        %v663 = vsel %vm662, %v655, %v659
        %v664 = vand.u32 2147483647, %v513
        %vm665 = vcmp.eq.f32.partialorder %v664, 8.507059e+37
        %v666 = vand.u32 %v513, 2147483648
        %v667 = vor.u32 1.1754944e-38, %v666
        %v668 = vsel %vm665, %v667, %v663
        %v669 = vmul.f32 1.0, %v668
        %v670 = vrcp.pop %v514
        %v671 = vmul.f32 %v514, %v670
        %v672 = vsub.f32 1.0, %v671
        %v673 = vmul.f32 %v670, %v672
        %v674 = vadd.f32 %v670, %v673
        %vm675 = vweird.f32 %v514
        %vm676 = vweird.f32 %v670
        %vm677 = vmor %vm675, %vm676
        %v678 = vsel %vm677, %v670, %v674
        %v679 = vand.u32 2147483647, %v514
        %vm680 = vcmp.eq.f32.partialorder %v679, 8.507059e+37
        %v681 = vand.u32 %v514, 2147483648
        %v682 = vor.u32 1.1754944e-38, %v681
        %v683 = vsel %vm680, %v682, %v678
        %v684 = vmul.f32 1.0, %v683
        %v685 = vrcp.pop %v515
        %v686 = vmul.f32 %v515, %v685
        %v687 = vsub.f32 1.0, %v686
        %v688 = vmul.f32 %v685, %v687
        %v689 = vadd.f32 %v685, %v688
        %vm690 = vweird.f32 %v515
        %vm691 = vweird.f32 %v685
        %vm692 = vmor %vm690, %vm691
        %v693 = vsel %vm692, %v685, %v689
        %v694 = vand.u32 2147483647, %v515
        %vm695 = vcmp.eq.f32.partialorder %v694, 8.507059e+37
        %v696 = vand.u32 %v515, 2147483648
        %v697 = vor.u32 1.1754944e-38, %v696
        %v698 = vsel %vm695, %v697, %v693
        %v699 = vmul.f32 1.0, %v698
        %v700 = vrcp.pop %v516
        %v701 = vmul.f32 %v516, %v700
        %v702 = vsub.f32 1.0, %v701
        %v703 = vmul.f32 %v700, %v702
        %v704 = vadd.f32 %v700, %v703
        %vm705 = vweird.f32 %v516
        %vm706 = vweird.f32 %v700
        %vm707 = vmor %vm705, %vm706
        %v708 = vsel %vm707, %v700, %v704
        %v709 = vand.u32 2147483647, %v516
        %vm710 = vcmp.eq.f32.partialorder %v709, 8.507059e+37
        %v711 = vand.u32 %v516, 2147483648
        %v712 = vor.u32 1.1754944e-38, %v711
        %v713 = vsel %vm710, %v712, %v708
        %v714 = vmul.f32 1.0, %v713
        %v715 = vrcp.pop %v517
        %v716 = vmul.f32 %v517, %v715
        %v717 = vsub.f32 1.0, %v716
        %v718 = vmul.f32 %v715, %v717
        %v719 = vadd.f32 %v715, %v718
        %vm720 = vweird.f32 %v517
        %vm721 = vweird.f32 %v715
        %vm722 = vmor %vm720, %vm721
        %v723 = vsel %vm722, %v715, %v719
        %v724 = vand.u32 2147483647, %v517
        %vm725 = vcmp.eq.f32.partialorder %v724, 8.507059e+37
        %v726 = vand.u32 %v517, 2147483648
        %v727 = vor.u32 1.1754944e-38, %v726
        %v728 = vsel %vm725, %v727, %v723
        %v729 = vmul.f32 1.0, %v728
        %v730 = vrcp.pop %v518
        %v731 = vmul.f32 %v518, %v730
        %v732 = vsub.f32 1.0, %v731
        %v733 = vmul.f32 %v730, %v732
        %v734 = vadd.f32 %v730, %v733
        %vm735 = vweird.f32 %v518
        %vm736 = vweird.f32 %v730
        %vm737 = vmor %vm735, %vm736
        %v738 = vsel %vm737, %v730, %v734
        %v739 = vand.u32 2147483647, %v518
        %vm740 = vcmp.eq.f32.partialorder %v739, 8.507059e+37
        %v741 = vand.u32 %v518, 2147483648
        %v742 = vor.u32 1.1754944e-38, %v741
        %v743 = vsel %vm740, %v742, %v738
        %v744 = vmul.f32 1.0, %v743
        %v745 = vrcp.pop %v519
        %v746 = vmul.f32 %v519, %v745
        %v747 = vsub.f32 1.0, %v746
        %v748 = vmul.f32 %v745, %v747
        %v749 = vadd.f32 %v745, %v748
        %vm750 = vweird.f32 %v519
        %vm751 = vweird.f32 %v745
        %vm752 = vmor %vm750, %vm751
        %v753 = vsel %vm752, %v745, %v749
        %v754 = vand.u32 2147483647, %v519
        %vm755 = vcmp.eq.f32.partialorder %v754, 8.507059e+37
        %v756 = vand.u32 %v519, 2147483648
        %v757 = vor.u32 1.1754944e-38, %v756
        %v758 = vsel %vm755, %v757, %v753
        %v759 = vmul.f32 1.0, %v758
        %761 = vset.pattern.permute.xlu0 0
        %762 = vperm.xlu0 %761, %v534
        %v763 = vpop.permute.xlu0 %762
        %766 = vset.pattern.permute.xlu0 0
        %767 = vperm.xlu0 %766, %v549
        %v768 = vpop.permute.xlu0 %767
        %771 = vset.pattern.permute.xlu0 0
        %772 = vperm.xlu0 %771, %v564
        %v773 = vpop.permute.xlu0 %772
        %776 = vset.pattern.permute.xlu0 0
        %777 = vperm.xlu0 %776, %v579
        %v778 = vpop.permute.xlu0 %777
        %781 = vset.pattern.permute.xlu0 0
        %782 = vperm.xlu0 %781, %v594
        %v783 = vpop.permute.xlu0 %782
        %786 = vset.pattern.permute.xlu0 0
        %787 = vperm.xlu0 %786, %v609
        %v788 = vpop.permute.xlu0 %787
        %791 = vset.pattern.permute.xlu0 0
        %792 = vperm.xlu0 %791, %v624
        %v793 = vpop.permute.xlu0 %792
        %796 = vset.pattern.permute.xlu0 0
        %797 = vperm.xlu0 %796, %v639
        %v798 = vpop.permute.xlu0 %797
        %801 = vset.pattern.permute.xlu0 0
        %802 = vperm.xlu0 %801, %v654
        %v803 = vpop.permute.xlu0 %802
        %806 = vset.pattern.permute.xlu0 0
        %807 = vperm.xlu0 %806, %v669
        %v808 = vpop.permute.xlu0 %807
        %811 = vset.pattern.permute.xlu0 0
        %812 = vperm.xlu0 %811, %v684
        %v813 = vpop.permute.xlu0 %812
        %816 = vset.pattern.permute.xlu0 0
        %817 = vperm.xlu0 %816, %v699
        %v818 = vpop.permute.xlu0 %817
        %821 = vset.pattern.permute.xlu0 0
        %822 = vperm.xlu0 %821, %v714
        %v823 = vpop.permute.xlu0 %822
        %826 = vset.pattern.permute.xlu0 0
        %827 = vperm.xlu0 %826, %v729
        %v828 = vpop.permute.xlu0 %827
        %831 = vset.pattern.permute.xlu0 0
        %832 = vperm.xlu0 %831, %v744
        %v833 = vpop.permute.xlu0 %832
        %836 = vset.pattern.permute.xlu0 0
        %837 = vperm.xlu0 %836, %v759
        %v838 = vpop.permute.xlu0 %837
        %v840 = vmul.f32 %v223, %v763
        %v841 = vmul.f32 %v224, %v768
        %v842 = vmul.f32 %v225, %v773
        %v843 = vmul.f32 %v226, %v778
        %v844 = vmul.f32 %v227, %v783
        %v845 = vmul.f32 %v228, %v788
        %v846 = vmul.f32 %v229, %v793
        %v847 = vmul.f32 %v230, %v798
        %v848 = vmul.f32 %v231, %v803
        %v849 = vmul.f32 %v232, %v808
        %v850 = vmul.f32 %v233, %v813
        %v851 = vmul.f32 %v234, %v818
        %v852 = vmul.f32 %v235, %v823
        %v853 = vmul.f32 %v236, %v828
        %v854 = vmul.f32 %v237, %v833
        %v855 = vmul.f32 %v238, %v838
        %856 = vst [vmem:[%s217] sm:$0xff] %v840
        %857 = vst [vmem:[%s217 + $0x8] sm:$0xff] %v841
        %858 = vst [vmem:[%s217 + $0x10] sm:$0xff] %v842
        %859 = vst [vmem:[%s217 + $0x18] sm:$0xff] %v843
        %860 = vst [vmem:[%s217 + $0x20] sm:$0xff] %v844
        %861 = vst [vmem:[%s217 + $0x28] sm:$0xff] %v845
        %862 = vst [vmem:[%s217 + $0x30] sm:$0xff] %v846
        %863 = vst [vmem:[%s217 + $0x38] sm:$0xff] %v847
        %864 = vst [vmem:[%s217 + $0x40] sm:$0xff] %v848
        %865 = vst [vmem:[%s217 + $0x48] sm:$0xff] %v849
        %866 = vst [vmem:[%s217 + $0x50] sm:$0xff] %v850
        %867 = vst [vmem:[%s217 + $0x58] sm:$0xff] %v851
        %868 = vst [vmem:[%s217 + $0x60] sm:$0xff] %v852
        %869 = vst [vmem:[%s217 + $0x68] sm:$0xff] %v853
        %870 = vst [vmem:[%s217 + $0x70] sm:$0xff] %v854
        %871 = vst [vmem:[%s217 + $0x78] sm:$0xff] %v855
        %s872 = sand.u32 %s137, 1
        %s873 = scalar_lea.sflag [#allocation3], %s872
        %s874 = sand.u32 %s137, 1
        %s875 = smul.addr %s874, 128
        %s876 = scalar_lea.vmem [#allocation2], %s875
        // Predicated region
        $region41: #{channel_attention.1} parent=39 // pred_check
          %p877 = pneg %p147
        $region42: #{channel_attention.1} parent=39 // pred_check_branch
          %879 = sbr.rel (%p877) target = $region44
        $region43: #{channel_attention.1} parent=39 // pred_region
          %881 = vsyncadd %s873, 0
          %s882 = smul.addr %s19, 16
          %s883 = smul.addr %s882, 8
          %s884 = scalar_lea.hbm %s5, %s883
          %s885 = sshll.u32 %s876, 4
          %s886 = int_to_ptr.vmem [resolvable:$true] %s885
          %s887 = sshll.u32 %s884, 4
          %s888 = int_to_ptr.hbm [resolvable:$true] %s887
          %893 = dma.vmem_to_hbm [thread:$0]  %s886, 2048, %s888, %s873, 128, 128, 8
        $region44: #{channel_attention.1} parent=39 // pred_fallthru
          _
      $region40: #{channel_attention.1} parent=5 // pred_fallthru
        _
      %p894 = scmp.le.s32.totalorder 2, %s14
      // Predicated region
      $region45: #{channel_attention.1} parent=5 // pred_check
        %p895 = pneg %p894
      $region46: #{channel_attention.1} parent=5 // pred_check_branch
        %897 = sbr.rel (%p895) target = $region48
      $region47: #{channel_attention.1} parent=5 // pred_region
        %s898 = ssub.s32 %s14, 2
        // Predicated region
        $region49: #{channel_attention.1} parent=47 // pred_check
          %p899 = pneg %p153
        $region50: #{channel_attention.1} parent=47 // pred_check_branch
          %901 = sbr.rel (%p899) target = $region52
        $region51: #{channel_attention.1} parent=47 // pred_region
          %s902 = sand.u32 %s138, 1
          %s903 = scalar_lea.sflag [#allocation3], %s902
          %s904 = sand.u32 %s138, 1
          %s905 = smul.addr %s904, 128
          %s906 = scalar_lea.vmem [#allocation2], %s905
          %908 = dma.done %s903, 2048
        $region52: #{channel_attention.1} parent=47 // pred_fallthru
          _
      $region48: #{channel_attention.1} parent=5 // pred_fallthru
        _
    $region6: #{channel_attention.1} parent=1 // loop_footer
      %s18 = sadd.s32 1, %s14
    $region7: #{channel_attention.1} parent=1 // loop_footer_branch
      %13 = sbr.rel target = $region3
    $region8: #{channel_attention.1} parent=1 // loop_exit
      _
    %909 = vsyncpa [#allocation3], 1
    %s910 = scalar_lea.sflag [#allocation3], 1
    %911 = vsyncpa %s910, 1

</llo_original>
